<compile_context>
chip_gen: v7x
topology: tpu7x:2x2x1
jax: 0.10.0
libtpu: 0.0.40
codegen_flags: <defaults>
</compile_context>

<pallas_src>
import jax
import jax.numpy as jnp
from jax.experimental import pallas as pl
from jax.experimental.pallas import tpu as pltpu


# ----------------------------------------------------------------------------
# Single-evaluation kernel: exactly the module's forward(x, t).
# ----------------------------------------------------------------------------
def linear_odef_kernel(t_ref, x_ref, o_ref):
    # x_ref: (B, 2) f32 in VMEM; t_ref: (1,) f32 in SMEM; o_ref: (B, 2) f32.
    x = x_ref[...]
    x0 = x[:, 0:1]
    x1 = x[:, 1:2]
    bias = 0.3 * jnp.sin(0.5 * t_ref[0])          # scalar -> EUP
    o_ref[:, 0:1] = x1                            # z[:,0] =  1.0 * x[:,1]
    o_ref[:, 1:2] = -0.8 * x0 - 1.5 * x1 + bias   # z[:,1]


def linear_odef_true(x, t):
    """x: (B, 2) float32, t: scalar / (1,) / (1,1) float32 -> (B, 2) float32."""
    x = jnp.asarray(x, dtype=jnp.float32)
    t_flat = jnp.reshape(jnp.asarray(t, dtype=jnp.float32), (1,))
    B = x.shape[0]

    return pl.pallas_call(
        linear_odef_kernel,
        out_shape=jax.ShapeDtypeStruct((B, 2), jnp.float32),
        in_specs=[
            pl.BlockSpec(memory_space=pltpu.MemorySpace.SMEM),   # t (scalar)
            pl.BlockSpec(memory_space=pltpu.MemorySpace.VMEM),   # x
        ],
        out_specs=pl.BlockSpec(memory_space=pltpu.MemorySpace.VMEM),
    )(t_flat, x)


# ----------------------------------------------------------------------------
# Fused explicit-Euler integrator: n_steps evaluations of the same forward
# inside ONE pallas_call, state resident in VMEM scratch (no per-step HBM
# round-trips, no per-step launch overhead).
# ----------------------------------------------------------------------------
def make_euler_kernel(dt):
    def euler_kernel(t_sched_ref, x0_ref, o_ref, z_ref):
        step = pl.program_id(0)

        @pl.when(step == 0)
        def _init():
            z_ref[...] = x0_ref[...]

        z = z_ref[...]                       # (B, 2) current state (VMEM)
        z0 = z[:, 0:1]
        z1 = z[:, 1:2]
        bias = 0.3 * jnp.sin(0.5 * t_sched_ref[step])   # SMEM scalar -> EUP
        # dz/dt exactly as in the module forward; Euler update on the VPU.
        z_ref[:, 0:1] = z0 + dt * z1
        z_ref[:, 1:2] = z1 + dt * (-0.8 * z0 - 1.5 * z1 + bias)

        @pl.when(step == pl.num_programs(0) - 1)
        def _finalize():
            o_ref[...] = z_ref[...]

    return euler_kernel


def linear_odef_euler_fused(x0, t_schedule, dt):
    """Integrate z' = f(z, t) with explicit Euler, fully fused in one kernel.

    x0: (B, 2) f32 initial state, t_schedule: (n_steps,) f32, dt: python float.
    Returns the final state (B, 2).
    """
    x0 = jnp.asarray(x0, dtype=jnp.float32)
    t_schedule = jnp.asarray(t_schedule, dtype=jnp.float32)
    B = x0.shape[0]
    n_steps = t_schedule.shape[0]

    grid_spec = pltpu.PrefetchScalarGridSpec(
        num_scalar_prefetch=1,                       # t schedule -> SMEM
        grid=(n_steps,),
        in_specs=[pl.BlockSpec((B, 2), lambda i, t_sched: (0, 0))],   # x0
        out_specs=pl.BlockSpec((B, 2), lambda i, t_sched: (0, 0)),    # z_final
        scratch_shapes=[pltpu.VMEM((B, 2), jnp.float32)],             # state z
    )
    return pl.pallas_call(
        make_euler_kernel(float(dt)),
        out_shape=jax.ShapeDtypeStruct((B, 2), jnp.float32),
        grid_spec=grid_spec,
        compiler_params=pltpu.CompilerParams(
            dimension_semantics=("arbitrary",)),      # sequential recurrence
    )(t_schedule, x0)


# ----------------------------------------------------------------------------
# Pure-JAX references.
# ----------------------------------------------------------------------------
def _f_ref(z, t):
    z0 = z[:, 0:1]
    z1 = z[:, 1:2]
    return jnp.concatenate([z1, -0.8 * z0 - 1.5 * z1 + 0.3 * jnp.sin(0.5 * t)],
                           axis=1)


def _euler_ref(x0, t_schedule, dt):
    z = x0
    for i in range(t_schedule.shape[0]):
        z = z + dt * _f_ref(z, t_schedule[i])
    return z


if __name__ == "__main__":
    key = jax.random.PRNGKey(0)
    kx, kt, kw = jax.random.split(key, 3)

    # Shapes implied by the module's forward: x (1, 2) state, t (1, 1) time.
    x = jax.random.normal(kx, (1, 2), dtype=jnp.float32)
    t = jax.random.uniform(kt, (1, 1), dtype=jnp.float32)

    # Deterministically-initialized but UNUSED lin1 weight (as in PyTorch).
    _lin1_weight = jax.random.normal(kw, (2, 2), dtype=jnp.float32)  # unused

    # --- single forward evaluation (module semantics) ---
    out = jax.block_until_ready(linear_odef_true(x, t))
    ref = _f_ref(x, t[0, 0])
    assert out.shape == (1, 2) and out.dtype == jnp.float32
    assert jnp.allclose(out, ref, atol=1e-5, rtol=1e-5)

    # --- fused multi-step Euler integration (per-call overhead amortized) ---
    n_steps = 16
    dt = 0.05
    t_schedule = jnp.arange(n_steps, dtype=jnp.float32) * dt
    z_final = jax.block_until_ready(linear_odef_euler_fused(x, t_schedule, dt))
    z_ref = _euler_ref(x, t_schedule, dt)
    assert z_final.shape == (1, 2) and z_final.dtype == jnp.float32
    assert jnp.allclose(z_final, z_ref, atol=1e-4, rtol=1e-4)

    # TODO(synk): forward_with_grad / flatten_parameters (autograd plumbing of
    # the ODEF base class) are training-loop utilities, not forward compute,
    # and are not translated to Pallas.
    print("KERNEL_OK")
</pallas_src>

<mosaic_0001>
module attributes {stable_mosaic.version = 11 : i64} {
  func.func @linear_odef_kernel(%arg0: memref<1xf32, #tpu.memory_space<smem>>, %arg1: memref<1x2xf32, #tpu.memory_space<vmem>>, %arg2: memref<1x2xf32, #tpu.memory_space<vmem>>) attributes {dimension_semantics = [], scalar_prefetch = 0 : i64, scratch_operands = 0 : i64, tpu.core_type = #tpu.core_type<tc>} {
    %c0 = arith.constant 0 : index
    %c0_0 = arith.constant 0 : index
    %0 = vector.load %arg1[%c0, %c0_0] : memref<1x2xf32, #tpu.memory_space<vmem>>, vector<1x2xf32>
    %1 = vector.extract_strided_slice %0 {offsets = [0, 0], sizes = [1, 1], strides = [1, 1]} : vector<1x2xf32> to vector<1x1xf32>
    %2 = vector.extract_strided_slice %0 {offsets = [0, 1], sizes = [1, 1], strides = [1, 1]} : vector<1x2xf32> to vector<1x1xf32>
    %c0_1 = arith.constant 0 : index
    %3 = memref.load %arg0[%c0_1] : memref<1xf32, #tpu.memory_space<smem>>
    %cst = arith.constant 5.000000e-01 : f32
    %4 = arith.mulf %cst, %3 : f32
    %5 = math.sin %4 : f32
    %cst_2 = arith.constant 3.000000e-01 : f32
    %6 = arith.mulf %cst_2, %5 : f32
    %c0_3 = arith.constant 0 : index
    %c0_4 = arith.constant 0 : index
    %7 = vector.load %arg2[%c0_3, %c0_4] : memref<1x2xf32, #tpu.memory_space<vmem>>, vector<1x1xf32>
    tpu.vector_store %arg2[%c0_3, %c0_4], %2 {strides = array<i32>} : memref<1x2xf32, #tpu.memory_space<vmem>>, vector<1x1xf32>,
    %cst_5 = arith.constant -8.000000e-01 : f32
    %8 = vector.broadcast %cst_5 : f32 to vector<1x1xf32>
    %9 = arith.mulf %8, %1 : vector<1x1xf32>
    %cst_6 = arith.constant 1.500000e+00 : f32
    %10 = vector.broadcast %cst_6 : f32 to vector<1x1xf32>
    %11 = arith.mulf %10, %2 : vector<1x1xf32>
    %12 = arith.subf %9, %11 : vector<1x1xf32>
    %13 = vector.broadcast %6 : f32 to vector<1x1xf32>
    %14 = arith.addf %12, %13 : vector<1x1xf32>
    %c0_7 = arith.constant 0 : index
    %c1 = arith.constant 1 : index
    %15 = vector.load %arg2[%c0_7, %c1] : memref<1x2xf32, #tpu.memory_space<vmem>>, vector<1x1xf32>
    tpu.vector_store %arg2[%c0_7, %c1], %14 {strides = array<i32>} : memref<1x2xf32, #tpu.memory_space<vmem>>, vector<1x1xf32>,
    return
  }
}

</mosaic_0001>

<llo_original>
// kernel: tpu_custom_call.1
$region0: #{tpu_custom_call.1}
  #allocation0 [shape = 'u32[]', space=smem, size = 0x4, offset = 0x4, fixed_abs, tag = 'smem constant byte address 0x4 - core index']
  #allocation1 [shape = 'u32[144,128]{1,0:T(1,128)}', space=vmem, size = 0x12000, scoped, tag = 'internal scratch']
  #allocation2 [shape = 'f32[1]{0:T(128)S(6)}', space=smem, size = 0x200, scoped, tag = 'scoped memory for tpu_custom_call.1']
  %s0 = inlined_call_operand.<no memory space> [shape: f32[1], index: 0, kind: input, shape index: {}]
  %s1 = inlined_call_operand.vmem [shape: f32[1,2], index: 1, kind: input, shape index: {}]
  %s2 = inlined_call_operand.hbm [shape: f32[1,2], index: 2, kind: output, shape index: {}]
  %s3 = sld [smem:[#allocation0]]
  $region18: #{tpu_custom_call.1} parent=0
    _
  %s5 = ssub.s32 1, %s3
  %s6 = scalar_select 0, %s5, %s3
  %7 = sst [smem:[#allocation2]] %s0
  $region1: #{tpu_custom_call.1} parent=0
    #allocation3 [shape = 'u8[512]{0}', space=vmem, size = 0x400, scoped, tag = 'output window, operand 0, single buffered']
    #allocation4 [shape = 's32[1]{0}', space=sflag, size = 0x4, scoped, tag = 'scoped memory for tpu_custom_call.1']
    %8 = vsyncpa [#allocation4], 0
    // Predicated region
    $region2: #{tpu_custom_call.1} parent=1 // pred_check
      _
    $region3: #{tpu_custom_call.1} parent=1 // pred_check_branch
      %10 = sbr.rel (0) target = $region5
    $region4: #{tpu_custom_call.1} parent=1 // pred_region
      _
    $region5: #{tpu_custom_call.1} parent=1 // pred_fallthru
      _
    // Predicated region
    $region6: #{tpu_custom_call.1} parent=1 // pred_check
      _
    $region7: #{tpu_custom_call.1} parent=1 // pred_check_branch
      %12 = sbr.rel (0) target = $region9
    $region8: #{tpu_custom_call.1} parent=1 // pred_region
      _
    $region9: #{tpu_custom_call.1} parent=1 // pred_fallthru
      _
    %v13 = vld [vmem:[%s1] sm:$0x1]
    %s14 = sld [smem:[#allocation2]]
    %s15 = smul.f32 %s14, 0.5
    %v16 = vstv %s15
    %v17 = vand.u32 2147483647, %v16
    %vm18 = vcmp.le.f32.partialorder %v17, 0.7853982
    %vm19 = vcmp.lt.s32.totalorder %v16, 0
    %v20 = vand.u32 %v16, 2139095040
    %v21 = vshrl.u32 %v20, 23
    %v22 = vsub.s32 %v21, 127
    %v23 = vand.u32 2147483647, %v16
    %v24 = vand.u32 %v23, 8388607
    %v25 = vor.u32 %v24, 8388608
    %v26 = vsub.s32 0, %v25
    %v27 = vadd.s32 %v22, 1
    %vm28 = vcmp.gt.s32.totalorder %v27, 0
    %v29 = vsel %vm28, %v27, 0
    %v30 = vshrl.u32 %v29, 5
    %v31 = vand.u32 %v29, 31
    %v32 = vsub.s32 32, %v31
    %v33 = vshrl.u32 683565275, %v32
    %v34 = vshll.u32 683565275, %v31
    %v35 = vshrl.u32 2475754826, %v32
    %v36 = vor.u32 %v34, %v35
    %v37 = vshll.u32 2475754826, %v31
    %v38 = vshrl.u32 2131351028, %v32
    %v39 = vor.u32 %v37, %v38
    %v40 = vshll.u32 2131351028, %v31
    %v41 = vshrl.u32 2102212464, %v32
    %v42 = vor.u32 %v40, %v41
    %v43 = vshll.u32 2102212464, %v31
    %v44 = vshrl.u32 920167782, %v32
    %v45 = vor.u32 %v43, %v44
    %v46 = vshll.u32 920167782, %v31
    %v47 = vshrl.u32 1326507024, %v32
    %v48 = vor.u32 %v46, %v47
    %vm49 = vcmp.lt.s32.totalorder %v30, 1
    %vm50 = vcmp.lt.s32.totalorder %v30, 2
    %vm51 = vcmp.lt.s32.totalorder %v30, 3
    %vm52 = vcmp.lt.s32.totalorder %v30, 4
    %v53 = vsel %vm49, %v33, %v36
    %v54 = vsel %vm52, %v42, 2102212464
    %v55 = vsel %vm51, %v39, %v54
    %v56 = vsel %vm50, %v53, %v55
    %v57 = vsel %vm49, %v36, %v39
    %v58 = vsel %vm52, %v45, 920167782
    %v59 = vsel %vm51, %v42, %v58
    %v60 = vsel %vm50, %v57, %v59
    %v61 = vsel %vm49, %v39, %v42
    %v62 = vsel %vm52, %v48, 1326507024
    %v63 = vsel %vm51, %v45, %v62
    %v64 = vsel %vm50, %v61, %v63
    %v65 = vshll.u32 %v25, 8
    %v66 = vmul.u32.u64.compose %v65, %v64
    %v67 = vextract.low.u32 %v66
    %v68 = vextract.high.u32 %v66
    %v69 = vmul.u32.u64.compose %v65, %v60
    %v70 = vextract.low.u32 %v69
    %v71 = vextract.high.u32 %v69
    %v72 = vmul.u32 %v65, %v56
    %v73 = vadd.s32 %v68, %v70
    %vm74 = vc.u32 %v68, %v70
    %v75 = vadd.s32 %v71, 1
    %v76 = vsel %vm74, %v75, %v71
    %v77 = vadd.s32 %v72, %v76
    %v78 = vadd.s32 %v77, 536870912
    %v79 = vshrl.u32 %v78, 30
    %v80 = vshll.u32 %v79, 30
    %v81 = vsub.s32 %v77, %v80
    %vm82 = vcmp.lt.s32.totalorder %v81, 0
    %v83 = vsub.s32 0, %v81
    %v84 = vsel %vm82, %v83, %v81
    %v85 = vclz %v84
    %v86 = vsub.s32 %v85, 2
    %vm87 = vcmp.gt.s32.totalorder 0, %v86
    %v88 = vsel %vm87, 0, %v86
    %v89 = vsub.s32 32, %v88
    %v90 = vshll.u32 %v81, %v88
    %v91 = vshrl.u32 %v73, %v89
    %v92 = vor.u32 %v90, %v91
    %v93 = vsub.s32 4294967266, %v88
    %v94 = vadd.s32 %v93, 127
    %v95 = vshll.u32 %v94, 23
    %v96 = vor.u32 4788187, %v95
    %v97 = vand.u32 2147483647, %v96
    %v99 = vcvt.s32.f32 %v92
    %v100 = vmul.f32 %v99, %v97
    %v101 = vxor.u32 %v100, 2147483648
    %v102 = vsel %vm19, %v101, %v100
    %v103 = vsub.s32 4, %v79
    %v104 = vsel %vm19, %v103, %v79
    %v105 = vsel %vm18, %v16, %v102
    %v106 = vsel %vm18, 0, %v104
    %v107 = vcosq.f32.pop %v105
    %v108 = vsinq.f32.pop %v105
    %vm109 = vweird.f32 %v16
    %v110 = vadd.s32 %v106, 3
    %v111 = vand.u32 %v110, 3
    %vm112 = vcmp.lt.s32.totalorder %v111, 2
    %vm113 = vcmp.eq.s32.totalorder %v111, 0
    %v114 = vxor.u32 %v108, 2147483648
    %v115 = vsel %vm113, %v107, %v114
    %vm116 = vcmp.eq.s32.totalorder %v111, 2
    %v117 = vxor.u32 %v107, 2147483648
    %v118 = vsel %vm116, %v117, %v108
    %v119 = vsel %vm112, %v115, %v118
    %v120 = vsel %vm109, nan, %v119
    %s121 = vtos %v120
    %s122 = smul.f32 %s121, 0.3
    %v124 = vlaneseq
    %v125 = vshrl.u32 %v124, 7
    %v126 = vsub.s32 0, %v125
    %v127 = vrot.slane %v13, %v126
    %128 = vrot.lane.b32.xlu0 %v127, 127
    %v129 = vpop.permute.xlu0 %128
    %vm131 = vcmask 0
    %132 = vst.msk [vmem:[#allocation3] sm:$0x1] %vm131, %v129
    %v133 = vmul.f32 %v13, -0.8
    %v134 = vmul.f32 %v13, 1.5
    %136 = vrot.lane.b32.xlu0 %v134, 127
    %v137 = vpop.permute.xlu0 %136
    %v139 = vsub.f32 %v133, %v137
    %v140 = vstv %s122
    %v141 = vadd.f32 %v139, %v140
    %v143 = vlaneseq
    %v144 = vshrl.u32 %v143, 7
    %v145 = vsub.s32 0, %v144
    %v146 = vrot.slane %v141, %v145
    %147 = vrot.lane.b32.xlu0 %v146, 1
    %v148 = vpop.permute.xlu0 %147
    %vm150 = vcmask 8200
    %151 = vst.msk [vmem:[#allocation3] sm:$0x1] %vm150, %v148
    // Predicated region
    $region10: #{tpu_custom_call.1} parent=1 // pred_check
      _
    $region11: #{tpu_custom_call.1} parent=1 // pred_check_branch
      %153 = sbr.rel (0) target = $region13
    $region12: #{tpu_custom_call.1} parent=1 // pred_region
      %s155 = ssub.s32 16, 16
      %156 = vsyncadd [#allocation4], %s155
      %s158 = sshll.u32 [#allocation3], 4
      %s159 = int_to_ptr.vmem [resolvable:$true] %s158
      %161 = dma.vmem_to_hbm [thread:$0]  %s159, 16, %s2, [#allocation4]
    $region13: #{tpu_custom_call.1} parent=1 // pred_fallthru
      _
    // Predicated region
    $region14: #{tpu_custom_call.1} parent=1 // pred_check
      _
    $region15: #{tpu_custom_call.1} parent=1 // pred_check_branch
      %163 = sbr.rel (0) target = $region17
    $region16: #{tpu_custom_call.1} parent=1 // pred_region
      %164 = dma.done [#allocation4], 16
    $region17: #{tpu_custom_call.1} parent=1 // pred_fallthru
      _
    %165 = vsyncpa [#allocation4], 1

</llo_original>
